<compile_context>
chip_gen: v5e
topology: v5e:2x2
jax: 0.10.0
libtpu: 0.0.40
codegen_flags: <defaults>
</compile_context>

<pallas_src>
import jax
import jax.numpy as jnp
from jax import lax
from jax.experimental import pallas as pl
from jax.experimental.pallas import tpu as pltpu

R = 5          # relations ['P1P', 'P1A', 'P1V', 'P1K', 'self']
F_IN = 4       # node_features (forward reshapes feature to (1, -1, 4, 1))
HIDDEN = 4     # self.hidden == num_for_predict
EPS = 1e-5     # nn.LayerNorm default eps

LANE = 128
SUBLANE = 8
S_TILE_MAX = 2048        # sublane-groups per grid step: 2048*128 = 262144 lanes
                         # -> 5 MiB/tile (R=5, f32), ~10 MiB double-buffered:
                         # fits v5e/v6e/v7x scoped VMEM defaults (16/32/32 MiB).
MIN_PALLAS_LANES = 1024  # below this, XLA broadcast beats kernel dispatch cost
TILE_2D_MAX = 32768      # ragged-lane fallback tile (multiple of HIDDEN)

# Guards for the algebraic collapse: valid only for exactly these
# hyper-parameters (nb_block=1, K=1, T=len_input=1, chev/time filters=1,
# time_strides=1, LayerNorm over a size-1 axis).
assert F_IN == 4 and HIDDEN == 4 and R == 5
assert LANE % HIDDEN == 0 and TILE_2D_MAX % HIDDEN == 0
assert S_TILE_MAX % SUBLANE == 0


def _broadcast3d_kernel(pat_ref, out_ref):
    """Fill one (R, s_tile, 128) output tile from a resident (R, 8, 128) pattern.

    The pattern is ~R vregs, loaded once per step and kept in registers; the
    body is pure vst (1 store per output vreg) feeding the writeback DMA.
    Nothing tile-sized is ever read from VMEM or HBM.
    """
    pat = pat_ref[...]                              # (R, 8, 128) ~ R vregs
    s = out_ref.shape[1]                            # static block sublane-count
    n_full, rem = divmod(s, SUBLANE)
    if n_full:
        def body(j, carry):
            j8 = pl.multiple_of(j * SUBLANE, SUBLANE)
            out_ref[:, pl.ds(j8, SUBLANE), :] = pat
            return carry
        lax.fori_loop(0, n_full, body, 0, unroll=min(n_full, 8))
    if rem:                                         # static tail (< 8 sublanes)
        out_ref[:, pl.ds(n_full * SUBLANE, rem), :] = pat[:, :rem, :]


def _broadcast2d_kernel(pat_ref, out_ref):
    """Ragged-lane fallback: plain tile copy (pattern coupled to the tile)."""
    out_ref[...] = pat_ref[...]


def _pallas_constant_fill_3d(row, lanes):
    """Main path (lanes % 128 == 0): full-sublane lane-dense constant fill."""
    s_total = lanes // LANE

    # Tile the sublane-group axis; keep the grid count even when > 1 so the
    # "parallel" axis stays balanced across v7x's two TensorCores.
    if s_total <= S_TILE_MAX:
        s_tile = s_total                      # single step; full-dim block is legal
    else:
        num_tiles = pl.cdiv(s_total, S_TILE_MAX)
        if num_tiles % 2:
            num_tiles += 1
        s_tile = ((pl.cdiv(s_total, num_tiles) + SUBLANE - 1) // SUBLANE) * SUBLANE
    grid = pl.cdiv(s_total, s_tile)

    # Decoupled pattern slab: pat[r, s, l] = row[r, l % HIDDEN]; 20 KiB total,
    # independent of the tile size.  Constant index_map -> DMA'd once, stays
    # VMEM-resident (double-buffering this 20 KiB slab is negligible, so no
    # pl.Buffered(1) override is needed).
    pat = jnp.broadcast_to(
        jnp.tile(row, (1, LANE // HIDDEN))[:, None, :], (R, SUBLANE, LANE))

    return pl.pallas_call(
        _broadcast3d_kernel,
        out_shape=jax.ShapeDtypeStruct((R, s_total, LANE), jnp.float32),
        grid=(grid,),
        in_specs=[pl.BlockSpec((R, SUBLANE, LANE), lambda i: (0, 0, 0))],
        out_specs=pl.BlockSpec((R, s_tile, LANE), lambda i: (0, i, 0)),
        compiler_params=pltpu.CompilerParams(
            dimension_semantics=("parallel",)),      # v7x: shard tiles over 2 TCs
        cost_estimate=pl.CostEstimate(
            flops=0, transcendentals=0,
            bytes_accessed=R * lanes * 4 + R * SUBLANE * LANE * 4),
    )(pat)


def _pallas_constant_fill_2d(row, lanes):
    """Fallback for ragged lanes (lanes % 128 != 0): 2-D layout, masked tail."""
    tile = lanes if lanes <= TILE_2D_MAX else TILE_2D_MAX
    assert tile % HIDDEN == 0                 # every tile start keeps pattern phase 0
    pat = jnp.tile(row, (1, tile // HIDDEN))  # (R, tile)
    return pl.pallas_call(
        _broadcast2d_kernel,
        out_shape=jax.ShapeDtypeStruct((R, lanes), jnp.float32),
        grid=(pl.cdiv(lanes, tile),),
        in_specs=[pl.BlockSpec((R, tile), lambda i: (0, 0))],
        out_specs=pl.BlockSpec((R, tile), lambda i: (0, i)),
        compiler_params=pltpu.CompilerParams(
            dimension_semantics=("parallel",)),
        cost_estimate=pl.CostEstimate(
            flops=0, transcendentals=0, bytes_accessed=2 * R * lanes * 4),
    )(pat)


def init_params(key):
    """Deterministic synthetic parameters for the 5 MSTGCN branches."""
    keys = jax.random.split(key, 10)
    u = lambda k, shape: jax.random.uniform(k, shape, jnp.float32, -0.5, 0.5)
    wc = u(keys[0], (R, F_IN))            # ChebConv.lins[0].weight (1, F_IN) per relation
    bc = u(keys[1], (R,))                 # ChebConv.bias
    wt = u(keys[2], (R, 3))               # time conv weight (1,1,1,3)
    bt = u(keys[3], (R,))                 # time conv bias
    wr = u(keys[4], (R, F_IN))            # residual conv weight (1, F_IN, 1, 1)
    br = u(keys[5], (R,))                 # residual conv bias
    gamma = u(keys[6], (R,)) + 1.0        # LayerNorm weight
    beta = u(keys[7], (R,))               # LayerNorm bias
    fw = u(keys[8], (R, HIDDEN))          # final conv weight (HIDDEN, 1, 1, 1)
    fb = u(keys[9], (R, HIDDEN))          # final conv bias
    vecs = jnp.stack([wc, wr, fw, fb], axis=1)                         # (R, 4, 4)
    scal = jnp.stack([bc, wt[:, 1], bt, br, gamma, beta,
                      jnp.zeros((R,), jnp.float32),
                      jnp.zeros((R,), jnp.float32)], axis=1)           # (R, 8)
    return vecs, scal


def mygnn_forward(feature, edges, vecs, scal):
    """Pallas equivalent of mygnn.forward(feature, edge).

    `edges` is accepted for API parity but unused: ChebConv with K=1 performs
    no propagation, so edge_index never influences the output.  `feature` only
    determines N (the per-node math is provably dead code, see module header).
    """
    del edges
    x = jnp.asarray(feature, jnp.float32).reshape(-1, F_IN)   # (N, 4) -> fixes N
    n = x.shape[0]
    lanes = n * HIDDEN                                        # flattened (node, channel) axis

    # Algebraic collapse of each MSTGCN branch: out[r, n, o] = row[r, o].
    beta = scal[:, 5]                                         # (R,)        LayerNorm bias
    fw = vecs[:, 2, :]                                        # (R, HIDDEN) final conv weight
    fb = vecs[:, 3, :]                                        # (R, HIDDEN) final conv bias
    row = beta[:, None] * fw + fb                             # (R, HIDDEN)

    # Small-N fast path: kernel dispatch + one masked narrow-store grid step
    # would dwarf the ~KiB write; a plain XLA broadcast is strictly cheaper.
    if lanes < MIN_PALLAS_LANES:
        out = jnp.broadcast_to(row[:, None, :], (R, n, HIDDEN))
        return out.reshape(1, R * n, HIDDEN)

    if lanes % LANE == 0:
        out = _pallas_constant_fill_3d(row, lanes)            # (R, lanes//128, 128)
    else:
        out = _pallas_constant_fill_2d(row, lanes)            # (R, lanes)

    # Both layouts are [r][node][channel] row-major, so the torch.hstack of the
    # R (1, N, HIDDEN) branch outputs is a free reshape.
    return out.reshape(1, R * n, HIDDEN)


def ref_forward(feature, vecs, scal):
    """Pure-JAX reference: full (un-collapsed) per-branch math."""
    x = jnp.asarray(feature, jnp.float32).reshape(-1, F_IN)
    outs = []
    for r in range(R):
        wc, wr, fw, fb = vecs[r, 0], vecs[r, 1], vecs[r, 2], vecs[r, 3]
        bc, tw, tb, br, gamma, beta = [scal[r, j] for j in range(6)]
        z = jnp.maximum(x @ wc + bc, 0.0)[:, None]            # ChebConv K=1 + ReLU
        x_hat = tw * z + tb                                   # time conv (center tap only)
        res = (x @ wr + br)[:, None]                          # residual 1x1 conv
        y = jnp.maximum(res + x_hat, 0.0)
        ln = gamma * (y - y) * lax.rsqrt(jnp.zeros_like(y) + EPS) + beta  # size-1 LayerNorm
        outs.append(ln * fw[None, :] + fb[None, :])           # final conv
    return jnp.concatenate(outs, axis=0)[None]


if __name__ == "__main__":
    import numpy as np

    key = jax.random.PRNGKey(0)
    kf, kp, ke = jax.random.split(key, 3)
    vecs, scal = init_params(kp)

    # Primary case: exercises the full-sublane Pallas path (lanes = 4096).
    N = 1024
    feature = jax.random.normal(kf, (N, F_IN), jnp.float32)
    edges = [jax.random.randint(jax.random.fold_in(ke, i), (2, 8), 0, N, jnp.int32)
             for i in range(R)]                               # unused (K=1), API parity
    out = jax.block_until_ready(mygnn_forward(feature, edges, vecs, scal))
    assert out.shape == (1, R * N, HIDDEN), out.shape
    np.testing.assert_allclose(np.asarray(out),
                               np.asarray(ref_forward(feature, vecs, scal)),
                               rtol=1e-5, atol=1e-5)

    # Secondary cases: ragged-lane 2-D fallback (N=1000) and small-N XLA path (N=16).
    for n2 in (1000, 16):
        f2 = jax.random.normal(jax.random.fold_in(kf, n2), (n2, F_IN), jnp.float32)
        o2 = jax.block_until_ready(mygnn_forward(f2, edges, vecs, scal))
        assert o2.shape == (1, R * n2, HIDDEN), o2.shape
        np.testing.assert_allclose(np.asarray(o2),
                                   np.asarray(ref_forward(f2, vecs, scal)),
                                   rtol=1e-5, atol=1e-5)

    print("KERNEL_OK")
</pallas_src>

<mosaic_0001>
module attributes {stable_mosaic.version = 11 : i64} {
  func.func @_broadcast3d_kernel(%arg0: i32, %arg1: memref<5x8x128xf32, #tpu.memory_space<vmem>>, %arg2: memref<5x32x128xf32, #tpu.memory_space<vmem>>) attributes {dimension_semantics = [#tpu.dimension_semantics<parallel>], iteration_bounds = array<i64: 1>, scalar_prefetch = 0 : i64, scratch_operands = 0 : i64, tpu.core_type = #tpu.core_type<tc>, window_params = [{pipeline_mode = #tpu.pipeline_mode<synchronous>, transform_indices = @transform_0, window_bounds = array<i64: 5, 8, 128>}, {transform_indices = @transform_1, window_bounds = array<i64: 5, 32, 128>}]} {
    %c0 = arith.constant 0 : index
    %c0_0 = arith.constant 0 : index
    %c0_1 = arith.constant 0 : index
    %0 = vector.load %arg1[%c0, %c0_0, %c0_1] : memref<5x8x128xf32, #tpu.memory_space<vmem>>, vector<5x8x128xf32>
    %c0_i32 = arith.constant 0 : i32
    %c8_i32 = arith.constant 8 : i32
    %1 = arith.muli %c0_i32, %c8_i32 : i32
    %2 = tpu.assume_multiple %1, 8 : i32
    %c0_2 = arith.constant 0 : index
    %3 = arith.index_cast %2 : i32 to index
    %c0_3 = arith.constant 0 : index
    %4 = vector.load %arg2[%c0_2, %3, %c0_3] : memref<5x32x128xf32, #tpu.memory_space<vmem>>, vector<5x8x128xf32>
    tpu.vector_store %arg2[%c0_2, %3, %c0_3], %0 {strides = array<i32>} : memref<5x32x128xf32, #tpu.memory_space<vmem>>, vector<5x8x128xf32>,
    %c1_i32 = arith.constant 1 : i32
    %c8_i32_4 = arith.constant 8 : i32
    %5 = arith.muli %c1_i32, %c8_i32_4 : i32
    %6 = tpu.assume_multiple %5, 8 : i32
    %c0_5 = arith.constant 0 : index
    %7 = arith.index_cast %6 : i32 to index
    %c0_6 = arith.constant 0 : index
    %8 = vector.load %arg2[%c0_5, %7, %c0_6] : memref<5x32x128xf32, #tpu.memory_space<vmem>>, vector<5x8x128xf32>
    tpu.vector_store %arg2[%c0_5, %7, %c0_6], %0 {strides = array<i32>} : memref<5x32x128xf32, #tpu.memory_space<vmem>>, vector<5x8x128xf32>,
    %c2_i32 = arith.constant 2 : i32
    %c8_i32_7 = arith.constant 8 : i32
    %9 = arith.muli %c2_i32, %c8_i32_7 : i32
    %10 = tpu.assume_multiple %9, 8 : i32
    %c0_8 = arith.constant 0 : index
    %11 = arith.index_cast %10 : i32 to index
    %c0_9 = arith.constant 0 : index
    %12 = vector.load %arg2[%c0_8, %11, %c0_9] : memref<5x32x128xf32, #tpu.memory_space<vmem>>, vector<5x8x128xf32>
    tpu.vector_store %arg2[%c0_8, %11, %c0_9], %0 {strides = array<i32>} : memref<5x32x128xf32, #tpu.memory_space<vmem>>, vector<5x8x128xf32>,
    %c3_i32 = arith.constant 3 : i32
    %c8_i32_10 = arith.constant 8 : i32
    %13 = arith.muli %c3_i32, %c8_i32_10 : i32
    %14 = tpu.assume_multiple %13, 8 : i32
    %c0_11 = arith.constant 0 : index
    %15 = arith.index_cast %14 : i32 to index
    %c0_12 = arith.constant 0 : index
    %16 = vector.load %arg2[%c0_11, %15, %c0_12] : memref<5x32x128xf32, #tpu.memory_space<vmem>>, vector<5x8x128xf32>
    tpu.vector_store %arg2[%c0_11, %15, %c0_12], %0 {strides = array<i32>} : memref<5x32x128xf32, #tpu.memory_space<vmem>>, vector<5x8x128xf32>,
    %c4_i32 = arith.constant 4 : i32
    return
  }
  func.func @transform_0(%arg0: i32) -> (i32, i32, i32) {
    %c0_i32 = arith.constant 0 : i32
    %c0_i32_0 = arith.constant 0 : i32
    %c0_i32_1 = arith.constant 0 : i32
    %c0_i32_2 = arith.constant 0 : i32
    return %c0_i32, %c0_i32_0, %c0_i32_1 : i32, i32, i32
  }
  func.func @transform_1(%arg0: i32) -> (i32, i32, i32) {
    %c0_i32 = arith.constant 0 : i32
    %c0_i32_0 = arith.constant 0 : i32
    %c0_i32_1 = arith.constant 0 : i32
    return %c0_i32, %arg0, %c0_i32_0 : i32, i32, i32
  }
}

</mosaic_0001>

<llo_original>
// kernel: tpu_custom_call.1
$region0: #{tpu_custom_call.1}
  #allocation0 [shape = 'u32[]', space=smem, size = 0x4, offset = 0x4, fixed_abs, tag = 'smem constant byte address 0x4 - core index']
  #allocation1 [shape = 'u32[72,128]{1,0:T(1,128)}', space=vmem, size = 0x9000, scoped, tag = 'internal scratch']
  %s0 = inlined_call_operand.hbm [shape: f32[5,8,128], index: 0, kind: input, shape index: {}]
  %s1 = inlined_call_operand.hbm [shape: f32[5,32,128], index: 1, kind: output, shape index: {}]
  %s2 = sld [smem:[#allocation0]]
  $region18: #{tpu_custom_call.1} parent=0
    _
  %s4 = ssub.s32 1, %s2
  %s5 = scalar_select 0, %s4, %s2
  $region1: #{tpu_custom_call.1} parent=0
    #allocation2 [shape = 'u8[20480]{0}', space=vmem, size = 0x5000, scoped, tag = 'input window, operand 0, single buffered']
    #allocation3 [shape = 's32[1]{0}', space=sflag, size = 0x4, scoped, tag = 'scoped memory for tpu_custom_call.1']
    #allocation4 [shape = 's32[1]{0}', space=sflag, size = 0x4, scoped, tag = 'scoped memory for tpu_custom_call.1']
    #allocation5 [shape = 'u8[81920]{0}', space=vmem, size = 0x14000, scoped, tag = 'output window, operand 0, single buffered']
    %6 = vsyncpa [#allocation3], 0
    %7 = vsyncpa [#allocation4], 0
    // Predicated region
    $region2: #{tpu_custom_call.1} parent=1 // pred_check
      _
    $region3: #{tpu_custom_call.1} parent=1 // pred_check_branch
      %9 = sbr.rel (0) target = $region5
    $region4: #{tpu_custom_call.1} parent=1 // pred_region
      %11 = vsyncadd [#allocation3], 0
      %s12 = sshll.u32 %s0, 4
      %s13 = int_to_ptr.hbm [resolvable:$true] %s12
      %s14 = sshll.u32 [#allocation2], 4
      %s15 = int_to_ptr.vmem [resolvable:$true] %s14
      %20 = dma.hbm_to_vmem [thread:$0]  %s13, 640, %s15, [#allocation3], 128, 128, 8
    $region5: #{tpu_custom_call.1} parent=1 // pred_fallthru
      _
    // Predicated region
    $region6: #{tpu_custom_call.1} parent=1 // pred_check
      _
    $region7: #{tpu_custom_call.1} parent=1 // pred_check_branch
      %22 = sbr.rel (0) target = $region9
    $region8: #{tpu_custom_call.1} parent=1 // pred_region
      %24 = dma.done [#allocation3], 640
    $region9: #{tpu_custom_call.1} parent=1 // pred_fallthru
      _
    %v25 = vld [vmem:[#allocation2] sm:$0xff]
    %v26 = vld [vmem:[#allocation2 + $0x8] sm:$0xff]
    %v27 = vld [vmem:[#allocation2 + $0x10] sm:$0xff]
    %v28 = vld [vmem:[#allocation2 + $0x18] sm:$0xff]
    %v29 = vld [vmem:[#allocation2 + $0x20] sm:$0xff]
    %30 = vst [vmem:[#allocation5] sm:$0xff] %v25
    %31 = vst [vmem:[#allocation5 + $0x20] sm:$0xff] %v26
    %32 = vst [vmem:[#allocation5 + $0x40] sm:$0xff] %v27
    %33 = vst [vmem:[#allocation5 + $0x60] sm:$0xff] %v28
    %34 = vst [vmem:[#allocation5 + $0x80] sm:$0xff] %v29
    %s35 = scalar_lea.vmem [#allocation5], 8
    %36 = vst [vmem:[%s35] sm:$0xff] %v25
    %37 = vst [vmem:[%s35 + $0x20] sm:$0xff] %v26
    %38 = vst [vmem:[%s35 + $0x40] sm:$0xff] %v27
    %39 = vst [vmem:[%s35 + $0x60] sm:$0xff] %v28
    %40 = vst [vmem:[%s35 + $0x80] sm:$0xff] %v29
    %s41 = scalar_lea.vmem [#allocation5], 16
    %42 = vst [vmem:[%s41] sm:$0xff] %v25
    %43 = vst [vmem:[%s41 + $0x20] sm:$0xff] %v26
    %44 = vst [vmem:[%s41 + $0x40] sm:$0xff] %v27
    %45 = vst [vmem:[%s41 + $0x60] sm:$0xff] %v28
    %46 = vst [vmem:[%s41 + $0x80] sm:$0xff] %v29
    %s47 = scalar_lea.vmem [#allocation5], 24
    %48 = vst [vmem:[%s47] sm:$0xff] %v25
    %49 = vst [vmem:[%s47 + $0x20] sm:$0xff] %v26
    %50 = vst [vmem:[%s47 + $0x40] sm:$0xff] %v27
    %51 = vst [vmem:[%s47 + $0x60] sm:$0xff] %v28
    %52 = vst [vmem:[%s47 + $0x80] sm:$0xff] %v29
    // Predicated region
    $region10: #{tpu_custom_call.1} parent=1 // pred_check
      _
    $region11: #{tpu_custom_call.1} parent=1 // pred_check_branch
      %54 = sbr.rel (0) target = $region13
    $region12: #{tpu_custom_call.1} parent=1 // pred_region
      %56 = vsyncadd [#allocation4], 0
      %s57 = sshll.u32 [#allocation5], 4
      %s58 = int_to_ptr.vmem [resolvable:$true] %s57
      %s59 = sshll.u32 %s1, 4
      %s60 = int_to_ptr.hbm [resolvable:$true] %s59
      %65 = dma.vmem_to_hbm [thread:$0]  %s58, 2560, %s60, [#allocation4], 128, 128, 8
    $region13: #{tpu_custom_call.1} parent=1 // pred_fallthru
      _
    // Predicated region
    $region14: #{tpu_custom_call.1} parent=1 // pred_check
      _
    $region15: #{tpu_custom_call.1} parent=1 // pred_check_branch
      %67 = sbr.rel (0) target = $region17
    $region16: #{tpu_custom_call.1} parent=1 // pred_region
      %69 = dma.done [#allocation4], 2560
    $region17: #{tpu_custom_call.1} parent=1 // pred_fallthru
      _
    %70 = vsyncpa [#allocation3], 1
    %71 = vsyncpa [#allocation4], 1

</llo_original>
